<compile_context>
chip_gen: v6e
topology: v6e:2x2x1
jax: 0.10.0
libtpu: 0.0.40
codegen_flags: <defaults>
</compile_context>

<pallas_src>
import functools

import jax
import jax.numpy as jnp
import numpy as np
from jax.experimental import pallas as pl
from jax.experimental.pallas import tpu as pltpu


def _round_up(x, m):
    return ((x + m - 1) // m) * m


# --------------------------------------------------------------------------
# Linear (matmul + bias) kernel, tiled over the token (M) dimension.
# --------------------------------------------------------------------------

def _linear_kernel(x_ref, w_ref, b_ref, o_ref):
    # x_ref: (tm, Kp), w_ref: (Kp, Np), b_ref: (1, Np)
    acc = jnp.dot(x_ref[...], w_ref[...], preferred_element_type=jnp.float32)
    o_ref[...] = (acc + b_ref[...]).astype(o_ref.dtype)


def _prep_linear_params(weight, bias, lane=128):
    """weight: torch layout (Nout, K). Returns lane-padded (Kp, Np) matrix, (1, Np) bias."""
    n_out, k = weight.shape
    kp, np_ = _round_up(k, lane), _round_up(n_out, lane)
    wp = jnp.zeros((kp, np_), weight.dtype).at[:k, :n_out].set(weight.T)
    bp = jnp.zeros((1, np_), weight.dtype)
    if bias is not None:
        bp = bp.at[0, :n_out].set(bias)
    return wp, bp


def linear_pallas(x2d, wp, bp, n_out, *, tm=256):
    """x2d: (M, K).  wp: (Kp, Np) pre-padded weight.  bp: (1, Np).  Returns (M, n_out)."""
    M, K = x2d.shape
    Kp, Np = wp.shape

    tm_eff = min(tm, _round_up(M, 8))          # multiple of 8, capped at tm
    Mp = _round_up(M, tm_eff)

    xp = x2d
    if (Mp, Kp) != (M, K):
        xp = jnp.zeros((Mp, Kp), x2d.dtype).at[:M, :K].set(x2d)

    itemsize = jnp.dtype(x2d.dtype).itemsize
    out = pl.pallas_call(
        _linear_kernel,
        out_shape=jax.ShapeDtypeStruct((Mp, Np), x2d.dtype),
        grid_spec=pltpu.PrefetchScalarGridSpec(
            num_scalar_prefetch=0,
            grid=(Mp // tm_eff,),
            in_specs=[
                pl.BlockSpec((tm_eff, Kp), lambda i: (i, 0)),
                pl.BlockSpec((Kp, Np), lambda i: (0, 0)),   # weight resident in VMEM
                pl.BlockSpec((1, Np), lambda i: (0, 0)),
            ],
            out_specs=pl.BlockSpec((tm_eff, Np), lambda i: (i, 0)),
        ),
        compiler_params=pltpu.CompilerParams(
            dimension_semantics=("parallel",),
        ),
        cost_estimate=pl.CostEstimate(
            flops=2 * Mp * Kp * Np,
            transcendentals=0,
            bytes_accessed=(Mp * Kp + Kp * Np + Mp * Np) * itemsize,
        ),
    )(xp, wp, bp)
    return out[:M, :n_out]


# --------------------------------------------------------------------------
# Fused attention kernel: one batch element per grid point, all heads inside.
# --------------------------------------------------------------------------

def _attn_kernel(q_ref, k_ref, v_ref, bias_ref, o_ref, *, scale):
    # q_ref/k_ref/v_ref: (H, N, D), bias_ref: (H, N, N)
    q = q_ref[...].astype(jnp.float32)
    k = k_ref[...].astype(jnp.float32)
    v = v_ref[...]

    # scores = (q @ k^T) * scale + bias   (batched over heads)
    s = jnp.einsum('hqd,hkd->hqk', q, k, preferred_element_type=jnp.float32)
    s = s * scale + bias_ref[...].astype(jnp.float32)

    # numerically-stable softmax over the key axis
    s = s - jnp.max(s, axis=-1, keepdims=True)
    p = jnp.exp(s)
    p = p * pl.reciprocal(jnp.sum(p, axis=-1, keepdims=True), approx=True)

    o = jnp.einsum('hqk,hkd->hqd', p.astype(v.dtype), v,
                   preferred_element_type=jnp.float32)
    o_ref[...] = o.astype(o_ref.dtype)


def attention_pallas(q, k, v, bias, scale):
    """q, k, v: (B, H, N, D).  bias: (Bb, H, N, N) with Bb in {1, B}.  Returns (B, H, N, D)."""
    B, H, N, D = q.shape
    Bb = bias.shape[0]
    kernel = functools.partial(_attn_kernel, scale=float(scale))
    itemsize = jnp.dtype(q.dtype).itemsize

    if Bb == 1:
        bias_map = lambda b: (0, 0, 0, 0)   # shared bias -> stays resident in VMEM
    else:
        bias_map = lambda b: (b, 0, 0, 0)

    return pl.pallas_call(
        kernel,
        out_shape=jax.ShapeDtypeStruct((B, H, N, D), q.dtype),
        grid_spec=pltpu.PrefetchScalarGridSpec(
            num_scalar_prefetch=0,
            grid=(B,),
            in_specs=[
                pl.BlockSpec((None, H, N, D), lambda b: (b, 0, 0, 0)),
                pl.BlockSpec((None, H, N, D), lambda b: (b, 0, 0, 0)),
                pl.BlockSpec((None, H, N, D), lambda b: (b, 0, 0, 0)),
                pl.BlockSpec((None, H, N, N), bias_map),
            ],
            out_specs=pl.BlockSpec((None, H, N, D), lambda b: (b, 0, 0, 0)),
        ),
        compiler_params=pltpu.CompilerParams(
            dimension_semantics=("parallel",),
        ),
        cost_estimate=pl.CostEstimate(
            flops=4 * B * H * N * N * D,
            transcendentals=B * H * N * N,
            bytes_accessed=(4 * B * H * N * D + Bb * H * N * N) * itemsize,
        ),
    )(q, k, v, bias)


# --------------------------------------------------------------------------
# Relative position index (same construction as the PyTorch module).
# --------------------------------------------------------------------------

def _make_relative_position_index(window_size):
    wh, ww = window_size
    coords = np.stack(np.meshgrid(np.arange(wh), np.arange(ww), indexing="ij"))
    coords_flatten = coords.reshape(2, -1)
    relative_coords = coords_flatten[:, :, None] - coords_flatten[:, None, :]
    relative_coords = relative_coords.transpose(1, 2, 0).copy()
    relative_coords[:, :, 0] += wh - 1
    relative_coords[:, :, 1] += ww - 1
    relative_coords[:, :, 0] *= 2 * ww - 1
    num_rel = (2 * wh - 1) * (2 * ww - 1) + 3
    P = wh * ww
    rpi = np.zeros((P + 1, P + 1), dtype=np.int32)
    rpi[1:, 1:] = relative_coords.sum(-1)
    rpi[0, 0:] = num_rel - 3
    rpi[0:, 0] = num_rel - 2
    rpi[0, 0] = num_rel - 1
    return jnp.asarray(rpi)


# --------------------------------------------------------------------------
# Attention module (synthetic, deterministically-initialized).
# --------------------------------------------------------------------------

class AttentionPallas:
    def __init__(self, dim, num_heads=8, qkv_bias=False, qk_scale=None,
                 window_size=None, attn_head_dim=None, key=jax.random.PRNGKey(0)):
        self.num_heads = num_heads
        head_dim = dim // num_heads
        if attn_head_dim is not None:
            head_dim = attn_head_dim
        all_head_dim = head_dim * num_heads
        self.dim = dim
        self.head_dim = head_dim
        self.all_head_dim = all_head_dim
        self.scale = qk_scale or head_dim ** (-0.5)

        k1, k2, k3, k4 = jax.random.split(key, 4)

        # qkv: Linear(dim, 3*all_head_dim, bias=False); torch layout (3*AHD, dim)
        bq = 1.0 / (dim ** 0.5)
        self.qkv_weight = jax.random.uniform(
            k1, (all_head_dim * 3, dim), jnp.float32, minval=-bq, maxval=bq)
        if qkv_bias:
            self.q_bias = jnp.zeros((all_head_dim,), jnp.float32)
            self.v_bias = jnp.zeros((all_head_dim,), jnp.float32)
            qkv_b = jnp.concatenate(
                [self.q_bias, jnp.zeros_like(self.v_bias), self.v_bias])
        else:
            self.q_bias = None
            self.v_bias = None
            qkv_b = None

        # proj: Linear(all_head_dim, dim); torch layout (dim, AHD)
        bp = 1.0 / (all_head_dim ** 0.5)
        self.proj_weight = jax.random.uniform(
            k3, (dim, all_head_dim), jnp.float32, minval=-bp, maxval=bp)
        self.proj_bias = jax.random.uniform(
            k4, (dim,), jnp.float32, minval=-bp, maxval=bp)

        # hoisted: transposed + lane-padded weights/biases for the Pallas linears
        self.qkv_wp, self.qkv_bp = _prep_linear_params(self.qkv_weight, qkv_b)
        self.proj_wp, self.proj_bp = _prep_linear_params(self.proj_weight, self.proj_bias)

        # relative position bias (BEiT-style), gathered in JAX glue
        if window_size:
            self.window_size = window_size
            self.num_relative_distance = (2 * window_size[0] - 1) * (2 * window_size[1] - 1) + 3
            self.relative_position_bias_table = 0.02 * jax.random.normal(
                k2, (self.num_relative_distance, num_heads), jnp.float32)
            self.relative_position_index = _make_relative_position_index(window_size)
        else:
            self.window_size = None
            self.relative_position_bias_table = None
            self.relative_position_index = None

    def __call__(self, x, rel_pos_bias=None):
        B, N, C = x.shape
        H, D, AHD = self.num_heads, self.head_dim, self.all_head_dim

        # --- QKV projection (Pallas) ---
        qkv = linear_pallas(x.reshape(B * N, C), self.qkv_wp, self.qkv_bp, 3 * AHD)
        qkv = qkv.reshape(B, N, 3, H, D).transpose(2, 0, 3, 1, 4)
        q, k, v = qkv[0], qkv[1], qkv[2]          # each (B, H, N, D)

        # --- additive attention bias (relative position bias + external bias) ---
        # Keep the batch dim as small as possible (1 when shared) so the Pallas
        # BlockSpec can keep the bias resident in VMEM across the batch grid.
        bias = None
        if self.relative_position_bias_table is not None:
            rpb = self.relative_position_bias_table[
                self.relative_position_index.reshape(-1)]
            rpb = rpb.reshape(N, N, -1).transpose(2, 0, 1)[None]   # (1, H, N, N)
            bias = rpb
        if rel_pos_bias is not None:
            rb = jnp.broadcast_to(
                rel_pos_bias, (rel_pos_bias.shape[0], H, N, N)).astype(jnp.float32)
            bias = rb if bias is None else bias + rb
        if bias is None:
            bias = jnp.zeros((1, H, N, N), jnp.float32)
        bias = bias.astype(jnp.float32)

        # --- fused attention (Pallas) ---
        out = attention_pallas(q, k, v, bias, self.scale)     # (B, H, N, D)
        out = out.transpose(0, 2, 1, 3).reshape(B, N, AHD)

        # --- output projection (Pallas) ---
        out = linear_pallas(out.reshape(B * N, AHD), self.proj_wp, self.proj_bp, C)
        return out.reshape(B, N, C)


# --------------------------------------------------------------------------
# Pure-JAX reference of the same math (mirrors the PyTorch forward).
# --------------------------------------------------------------------------

def attention_reference(model, x, rel_pos_bias=None):
    B, N, C = x.shape
    H, D = model.num_heads, model.head_dim
    qkv = x @ model.qkv_weight.T
    if model.q_bias is not None:
        qkv_b = jnp.concatenate(
            [model.q_bias, jnp.zeros_like(model.v_bias), model.v_bias])
        qkv = qkv + qkv_b
    qkv = qkv.reshape(B, N, 3, H, D).transpose(2, 0, 3, 1, 4)
    q, k, v = qkv[0], qkv[1], qkv[2]
    q = q * model.scale
    attn = q @ jnp.swapaxes(k, -2, -1)
    if model.relative_position_bias_table is not None:
        rpb = model.relative_position_bias_table[
            model.relative_position_index.reshape(-1)]
        rpb = rpb.reshape(N, N, -1).transpose(2, 0, 1)
        attn = attn + rpb[None]
    if rel_pos_bias is not None:
        attn = attn + rel_pos_bias
    attn = jax.nn.softmax(attn, axis=-1)
    out = jnp.swapaxes(attn @ v, 1, 2).reshape(B, N, -1)
    out = out @ model.proj_weight.T + model.proj_bias
    return out


if __name__ == "__main__":
    key = jax.random.PRNGKey(0)
    k_mod, k_x, k_bias, k_mod2, k_x2 = jax.random.split(key, 5)

    # --- case 1: external rel_pos_bias, no window ---
    B, N, dim = 2, 8, 32
    num_heads = 4
    model = AttentionPallas(dim=dim, num_heads=num_heads, qkv_bias=True,
                            window_size=None, key=k_mod)
    x = jax.random.normal(k_x, (B, N, dim), dtype=jnp.float32)
    rel_pos_bias = 0.1 * jax.random.normal(
        k_bias, (1, num_heads, N, N), dtype=jnp.float32)

    out = model(x, rel_pos_bias=rel_pos_bias)
    out = jax.block_until_ready(out)
    ref = attention_reference(model, x, rel_pos_bias=rel_pos_bias)
    assert out.shape == (B, N, dim), out.shape
    err1 = float(jnp.max(jnp.abs(out - ref)))
    assert jnp.allclose(out, ref, atol=2e-3, rtol=2e-3), f"case1 mismatch: {err1}"

    # --- case 2: BEiT window relative-position-bias table (N = wh*ww + 1) ---
    window_size = (7, 1)                       # 7*1 + 1 = 8 tokens
    model2 = AttentionPallas(dim=dim, num_heads=num_heads, qkv_bias=True,
                             window_size=window_size, key=k_mod2)
    x2 = jax.random.normal(k_x2, (B, N, dim), dtype=jnp.float32)
    out2 = jax.block_until_ready(model2(x2))
    ref2 = attention_reference(model2, x2)
    err2 = float(jnp.max(jnp.abs(out2 - ref2)))
    assert jnp.allclose(out2, ref2, atol=2e-3, rtol=2e-3), f"case2 mismatch: {err2}"

    print("KERNEL_OK")
</pallas_src>

<mosaic_0001>
module attributes {stable_mosaic.version = 11 : i64} {
  func.func @_linear_kernel(%arg0: i32, %arg1: memref<16x128xf32, #tpu.memory_space<vmem>>, %arg2: memref<128x128xf32, #tpu.memory_space<vmem>>, %arg3: memref<1x128xf32, #tpu.memory_space<vmem>>, %arg4: memref<16x128xf32, #tpu.memory_space<vmem>>) attributes {dimension_semantics = [#tpu.dimension_semantics<parallel>], iteration_bounds = array<i64: 1>, scalar_prefetch = 0 : i64, scratch_operands = 0 : i64, tpu.core_type = #tpu.core_type<tc>, window_params = [{transform_indices = @transform_0, window_bounds = array<i64: 16, 128>}, {pipeline_mode = #tpu.pipeline_mode<synchronous>, transform_indices = @transform_1, window_bounds = array<i64: 128, 128>}, {pipeline_mode = #tpu.pipeline_mode<synchronous>, transform_indices = @transform_2, window_bounds = array<i64: 1, 128>}, {transform_indices = @transform_3, window_bounds = array<i64: 16, 128>}]} {
    %c0 = arith.constant 0 : index
    %c0_0 = arith.constant 0 : index
    %0 = vector.load %arg1[%c0, %c0_0] : memref<16x128xf32, #tpu.memory_space<vmem>>, vector<16x128xf32>
    %c0_1 = arith.constant 0 : index
    %c0_2 = arith.constant 0 : index
    %1 = vector.load %arg2[%c0_1, %c0_2] : memref<128x128xf32, #tpu.memory_space<vmem>>, vector<128x128xf32>
    %cst = arith.constant dense<0.000000e+00> : vector<16x128xf32>
    %2 = tpu.matmul %0, %1, %cst {dimension_numbers = #tpu.dot_dimension_numbers<[1], [0], [0], [1], [0, 0, 1, 1], [], []>} : vector<16x128xf32>, vector<128x128xf32>, vector<16x128xf32> -> vector<16x128xf32>
    %c0_3 = arith.constant 0 : index
    %c0_4 = arith.constant 0 : index
    %3 = vector.load %arg3[%c0_3, %c0_4] : memref<1x128xf32, #tpu.memory_space<vmem>>, vector<1x128xf32>
    %4 = vector.broadcast %3 : vector<1x128xf32> to vector<16x128xf32>
    %5 = arith.addf %2, %4 : vector<16x128xf32>
    %c0_5 = arith.constant 0 : index
    %c0_6 = arith.constant 0 : index
    %6 = vector.load %arg4[%c0_5, %c0_6] : memref<16x128xf32, #tpu.memory_space<vmem>>, vector<16x128xf32>
    tpu.vector_store %arg4[%c0_5, %c0_6], %5 {strides = array<i32>} : memref<16x128xf32, #tpu.memory_space<vmem>>, vector<16x128xf32>,
    return
  }
  func.func @transform_0(%arg0: i32) -> (i32, i32) {
    %c0_i32 = arith.constant 0 : i32
    %c0_i32_0 = arith.constant 0 : i32
    return %arg0, %c0_i32 : i32, i32
  }
  func.func @transform_1(%arg0: i32) -> (i32, i32) {
    %c0_i32 = arith.constant 0 : i32
    %c0_i32_0 = arith.constant 0 : i32
    %c0_i32_1 = arith.constant 0 : i32
    return %c0_i32, %c0_i32_0 : i32, i32
  }
  func.func @transform_2(%arg0: i32) -> (i32, i32) {
    %c0_i32 = arith.constant 0 : i32
    %c0_i32_0 = arith.constant 0 : i32
    %c0_i32_1 = arith.constant 0 : i32
    return %c0_i32, %c0_i32_0 : i32, i32
  }
  func.func @transform_3(%arg0: i32) -> (i32, i32) {
    %c0_i32 = arith.constant 0 : i32
    %c0_i32_0 = arith.constant 0 : i32
    return %arg0, %c0_i32 : i32, i32
  }
}

</mosaic_0001>

<llo_original>
// kernel: tpu_custom_call.1
$region0: #{tpu_custom_call.1}
  #allocation0 [shape = 'u32[]', space=smem, size = 0x4, offset = 0x4, fixed_abs, tag = 'smem constant byte address 0x4 - core index']
  #allocation1 [shape = 'u32[144,128]{1,0:T(1,128)}', space=vmem, size = 0x12000, scoped, tag = 'internal scratch']
  %s0 = inlined_call_operand.hbm [shape: f32[16,128], index: 0, kind: input, shape index: {}]
  %s1 = inlined_call_operand.hbm [shape: f32[128,128], index: 1, kind: input, shape index: {}]
  %s2 = inlined_call_operand.vmem [shape: f32[1,128], index: 2, kind: input, shape index: {}]
  %s3 = inlined_call_operand.hbm [shape: f32[16,128], index: 3, kind: output, shape index: {}]
  %s4 = sld [smem:[#allocation0]]
  $region30: #{tpu_custom_call.1} parent=0
    _
  %s6 = ssub.s32 1, %s4
  %s7 = scalar_select 0, %s6, %s4
  $region1: #{tpu_custom_call.1} parent=0
    #allocation2 [shape = 'u8[8192]{0}', space=vmem, size = 0x2000, scoped, tag = 'input window, operand 0, single buffered']
    #allocation3 [shape = 's32[1]{0}', space=sflag, size = 0x4, scoped, tag = 'scoped memory for tpu_custom_call.1']
    #allocation4 [shape = 's32[1]{0}', space=sflag, size = 0x4, scoped, tag = 'scoped memory for tpu_custom_call.1']
    #allocation5 [shape = 'u8[65536]{0}', space=vmem, size = 0x10000, scoped, tag = 'input window, operand 1, single buffered']
    #allocation6 [shape = 's32[1]{0}', space=sflag, size = 0x4, scoped, tag = 'scoped memory for tpu_custom_call.1']
    #allocation7 [shape = 'u8[8192]{0}', space=vmem, size = 0x2000, scoped, tag = 'output window, operand 0, single buffered']
    %8 = vsyncpa [#allocation3], 0
    %9 = vsyncpa [#allocation6], 0
    %10 = vsyncpa [#allocation4], 0
    // Predicated region
    $region2: #{tpu_custom_call.1} parent=1 // pred_check
      _
    $region3: #{tpu_custom_call.1} parent=1 // pred_check_branch
      %12 = sbr.rel (0) target = $region5
    $region4: #{tpu_custom_call.1} parent=1 // pred_region
      %s14 = ssub.s32 256, 256
      %15 = vsyncadd [#allocation3], %s14
      %s16 = sshll.u32 [#allocation2], 4
      %s17 = int_to_ptr.vmem [resolvable:$true] %s16
      %22 = dma.hbm_to_vmem [thread:$0]  %s0, 256, %s17, [#allocation3], 128, 128, 8
    $region5: #{tpu_custom_call.1} parent=1 // pred_fallthru
      _
    // Predicated region
    $region6: #{tpu_custom_call.1} parent=1 // pred_check
      _
    $region7: #{tpu_custom_call.1} parent=1 // pred_check_branch
      %24 = sbr.rel (0) target = $region9
    $region8: #{tpu_custom_call.1} parent=1 // pred_region
      %s26 = ssub.s32 2048, 2048
      %27 = vsyncadd [#allocation6], %s26
      %s28 = sshll.u32 [#allocation5], 4
      %s29 = int_to_ptr.vmem [resolvable:$true] %s28
      %34 = dma.hbm_to_vmem [thread:$0]  %s1, 2048, %s29, [#allocation6], 128, 128, 8
    $region9: #{tpu_custom_call.1} parent=1 // pred_fallthru
      _
    // Predicated region
    $region10: #{tpu_custom_call.1} parent=1 // pred_check
      _
    $region11: #{tpu_custom_call.1} parent=1 // pred_check_branch
      %36 = sbr.rel (0) target = $region13
    $region12: #{tpu_custom_call.1} parent=1 // pred_region
      _
    $region13: #{tpu_custom_call.1} parent=1 // pred_fallthru
      _
    // Predicated region
    $region14: #{tpu_custom_call.1} parent=1 // pred_check
      _
    $region15: #{tpu_custom_call.1} parent=1 // pred_check_branch
      %38 = sbr.rel (0) target = $region17
    $region16: #{tpu_custom_call.1} parent=1 // pred_region
      %39 = dma.done [#allocation3], 256
    $region17: #{tpu_custom_call.1} parent=1 // pred_fallthru
      _
    // Predicated region
    $region18: #{tpu_custom_call.1} parent=1 // pred_check
      _
    $region19: #{tpu_custom_call.1} parent=1 // pred_check_branch
      %41 = sbr.rel (0) target = $region21
    $region20: #{tpu_custom_call.1} parent=1 // pred_region
      %42 = dma.done [#allocation6], 2048
    $region21: #{tpu_custom_call.1} parent=1 // pred_fallthru
      _
    %v43 = vld [vmem:[#allocation2] sm:$0xff]
    %v44 = vld [vmem:[#allocation2 + $0x8] sm:$0xff]
    %v45 = vld [vmem:[#allocation5] sm:$0xff]
    %v46 = vld [vmem:[#allocation5 + $0x8] sm:$0xff]
    %v47 = vld [vmem:[#allocation5 + $0x10] sm:$0xff]
    %v48 = vld [vmem:[#allocation5 + $0x18] sm:$0xff]
    %v49 = vld [vmem:[#allocation5 + $0x20] sm:$0xff]
    %v50 = vld [vmem:[#allocation5 + $0x28] sm:$0xff]
    %v51 = vld [vmem:[#allocation5 + $0x30] sm:$0xff]
    %v52 = vld [vmem:[#allocation5 + $0x38] sm:$0xff]
    %v53 = vld [vmem:[#allocation5 + $0x40] sm:$0xff]
    %v54 = vld [vmem:[#allocation5 + $0x48] sm:$0xff]
    %v55 = vld [vmem:[#allocation5 + $0x50] sm:$0xff]
    %v56 = vld [vmem:[#allocation5 + $0x58] sm:$0xff]
    %v57 = vld [vmem:[#allocation5 + $0x60] sm:$0xff]
    %v58 = vld [vmem:[#allocation5 + $0x68] sm:$0xff]
    %v59 = vld [vmem:[#allocation5 + $0x70] sm:$0xff]
    %v60 = vld [vmem:[#allocation5 + $0x78] sm:$0xff]
    %v61 = vld [vmem:[%s2] sm:$0x1]
    %v63 = vlaneseq
    %v64 = vshrl.u32 %v63, 7
    %v65 = vsub.s32 0, %v64
    %v66 = vrot.slane %v61, %v65
    %68 = vmatprep.subr.mxu0 0.0
    %69 = vmatpush1.msra.mxu0 %v60
    %70 = vmatprep.subr.mxu0 0.0
    %71 = vmatpush1.msra.mxu0 %v59
    %72 = vmatprep.subr.mxu0 0.0
    %73 = vmatpush1.msra.mxu0 %v58
    %74 = vmatprep.subr.mxu0 0.0
    %75 = vmatpush1.msra.mxu0 %v57
    %76 = vmatprep.subr.mxu0 0.0
    %77 = vmatpush1.msra.mxu0 %v56
    %78 = vmatprep.subr.mxu0 0.0
    %79 = vmatpush1.msra.mxu0 %v55
    %80 = vmatprep.subr.mxu0 0.0
    %81 = vmatpush1.msra.mxu0 %v54
    %82 = vmatprep.subr.mxu0 0.0
    %83 = vmatpush1.msra.mxu0 %v53
    %84 = vmatprep.subr.mxu0 0.0
    %85 = vmatpush1.msra.mxu0 %v52
    %86 = vmatprep.subr.mxu0 0.0
    %87 = vmatpush1.msra.mxu0 %v51
    %88 = vmatprep.subr.mxu0 0.0
    %89 = vmatpush1.msra.mxu0 %v50
    %90 = vmatprep.subr.mxu0 0.0
    %91 = vmatpush1.msra.mxu0 %v49
    %92 = vmatprep.subr.mxu0 0.0
    %93 = vmatpush1.msra.mxu0 %v48
    %94 = vmatprep.subr.mxu0 0.0
    %95 = vmatpush1.msra.mxu0 %v47
    %96 = vmatprep.subr.mxu0 0.0
    %97 = vmatpush1.msra.mxu0 %v46
    %98 = vmatprep.subr.mxu0 0.0
    %99 = vmatpush1.msra.mxu0 %v45
    %100 = vmatprep.subr.mxu0 0.0
    %101 = vmatpush2.msra.mxu0 0.0
    %102 = vmatprep.subr.mxu0 0.0
    %103 = vmatpush2.msra.mxu0 0.0
    %104 = vmatprep.subr.mxu0 0.0
    %105 = vmatpush2.msra.mxu0 0.0
    %106 = vmatprep.subr.mxu0 0.0
    %107 = vmatpush2.msra.mxu0 0.0
    %108 = vmatprep.subr.mxu0 0.0
    %109 = vmatpush2.msra.mxu0 0.0
    %110 = vmatprep.subr.mxu0 0.0
    %111 = vmatpush2.msra.mxu0 0.0
    %112 = vmatprep.subr.mxu0 0.0
    %113 = vmatpush2.msra.mxu0 0.0
    %114 = vmatprep.subr.mxu0 0.0
    %115 = vmatpush2.msra.mxu0 0.0
    %116 = vmatprep.subr.mxu0 0.0
    %117 = vmatpush2.msra.mxu0 0.0
    %118 = vmatprep.subr.mxu0 0.0
    %119 = vmatpush2.msra.mxu0 0.0
    %120 = vmatprep.subr.mxu0 0.0
    %121 = vmatpush2.msra.mxu0 0.0
    %122 = vmatprep.subr.mxu0 0.0
    %123 = vmatpush2.msra.mxu0 0.0
    %124 = vmatprep.subr.mxu0 0.0
    %125 = vmatpush2.msra.mxu0 0.0
    %126 = vmatprep.subr.mxu0 0.0
    %127 = vmatpush2.msra.mxu0 0.0
    %128 = vmatprep.subr.mxu0 0.0
    %129 = vmatpush2.msra.mxu0 0.0
    %130 = vmatprep.subr.mxu0 0.0
    %131 = vmatpush2.msra.mxu0 0.0
    %132 = vmatprep.mubr.f32.mxu0 0.0
    %133 = vmatmul.mubr.f32.gmra.mxu0 %v43
    %v134 = vpop.f32.mrf.mxu0
    %v135 = vadd.f32 %v66, %v134
    %v136 = vpop.f32.mrf.mxu0
    %137 = vmatprep.mubr.f32.mxu0 0.0
    %138 = vmatmul.mubr.f32.gmra.mxu0 %v44
    %v139 = vpop.f32.mrf.mxu0
    %v140 = vadd.f32 %v66, %v139
    %v141 = vpop.f32.mrf.mxu0
    %142 = vdwg.mxu0
    %143 = vst [vmem:[#allocation7] sm:$0xff] %v135
    %144 = vst [vmem:[#allocation7 + $0x8] sm:$0xff] %v140
    // Predicated region
    $region22: #{tpu_custom_call.1} parent=1 // pred_check
      _
    $region23: #{tpu_custom_call.1} parent=1 // pred_check_branch
      %146 = sbr.rel (0) target = $region25
    $region24: #{tpu_custom_call.1} parent=1 // pred_region
      %s148 = ssub.s32 256, 256
      %149 = vsyncadd [#allocation4], %s148
      %s150 = sshll.u32 [#allocation7], 4
      %s151 = int_to_ptr.vmem [resolvable:$true] %s150
      %156 = dma.vmem_to_hbm [thread:$0]  %s151, 256, %s3, [#allocation4], 128, 128, 8
    $region25: #{tpu_custom_call.1} parent=1 // pred_fallthru
      _
    // Predicated region
    $region26: #{tpu_custom_call.1} parent=1 // pred_check
      _
    $region27: #{tpu_custom_call.1} parent=1 // pred_check_branch
      %158 = sbr.rel (0) target = $region29
    $region28: #{tpu_custom_call.1} parent=1 // pred_region
      %159 = dma.done [#allocation4], 256
    $region29: #{tpu_custom_call.1} parent=1 // pred_fallthru
      _
    %160 = vsyncpa [#allocation3], 1
    %161 = vsyncpa [#allocation6], 1
    %162 = vsyncpa [#allocation4], 1

</llo_original>
